<compile_context>
chip_gen: v6e
topology: v6e:2x2x1
jax: 0.10.0
libtpu: 0.0.40
codegen_flags: <defaults>
</compile_context>

<pallas_src>
import functools

import jax
import jax.numpy as jnp
import numpy as np
from jax.experimental import pallas as pl
from jax.experimental.pallas import tpu as pltpu

EPS = 1e-5  # nn.LayerNorm default


# ----------------------------------------------------------------------------
# Kernel: per token-tile, all classes, everything lane-dense in packed layout.
#   h1 = relu(LN_dd(x @ p1))           packed as (T, C*dd)
#   h2 = relu(LN_d (h1 @ p2_bd))       packed as (T, C*d)
#   out = h2 @ p3_bd                   (T, C)
# ----------------------------------------------------------------------------
def csce_kernel(x_ref, p1_ref, p2_ref, p3_ref, g1_ref, b1_ref, g2_ref, b2_ref,
                m1_ref, m2_ref, o_ref):
    # Layer 1 for all classes at once: (T, d) @ (d, C*dd), bf16 in / f32 acc.
    h1 = jnp.dot(x_ref[...], p1_ref[...],
                 preferred_element_type=jnp.float32)          # (T, C*dd) f32

    # Segmented (per-class) LayerNorm over dd:
    # block-diagonal averaging matrix -> mean / centered variance on the MXU.
    m1 = m1_ref[...]                                          # (C*dd, C*dd)
    mu1 = jnp.dot(h1, m1, preferred_element_type=jnp.float32)
    c1 = h1 - mu1
    var1 = jnp.dot(c1 * c1, m1, preferred_element_type=jnp.float32)
    h1 = c1 * jax.lax.rsqrt(var1 + EPS) * g1_ref[...] + b1_ref[...]
    h1 = jnp.maximum(h1, 0.0)

    # Layer 2 for all classes: block-diagonal (C*dd, C*d) matmul.
    h2 = jnp.dot(h1.astype(p2_ref.dtype), p2_ref[...],
                 preferred_element_type=jnp.float32)          # (T, C*d) f32

    # Segmented LayerNorm over d (same trick).
    m2 = m2_ref[...]                                          # (C*d, C*d)
    mu2 = jnp.dot(h2, m2, preferred_element_type=jnp.float32)
    c2 = h2 - mu2
    var2 = jnp.dot(c2 * c2, m2, preferred_element_type=jnp.float32)
    h2 = c2 * jax.lax.rsqrt(var2 + EPS) * g2_ref[...] + b2_ref[...]
    h2 = jnp.maximum(h2, 0.0)

    # Layer 3: (T, C*d) @ (C*d, C) block-diagonal -> single (T, C) store.
    o_ref[...] = jnp.dot(h2.astype(p3_ref.dtype), p3_ref[...],
                         preferred_element_type=jnp.float32).astype(o_ref.dtype)


def _round_up8(v):
    return max(8, ((v + 7) // 8) * 8)


# ----------------------------------------------------------------------------
# Wrapper
# ----------------------------------------------------------------------------
def csce_forward(query_outputs, pro_features, w_dyn, b_dyn, g1, b1, g2, b2,
                 hidden_dim, dim_dynamic, token_tile=1024):
    lay_n, bs, nb, d = query_outputs.shape
    assert d == hidden_dim
    C = pro_features.shape[0]
    dd = dim_dynamic
    num_params = hidden_dim * dim_dynamic

    # Scaling guard: packed / block-diagonal layout is sized for small C.
    # TODO(synk): for large C (e.g. 80 detection classes) add a class-tile grid
    # axis ("arbitrary") instead of a single (C*dd, C*d) block-diagonal matrix.
    assert C * d <= 2048, "add a class-tile grid axis for large num_classes"

    # Dynamic-parameter generation: tiny (C, d) @ (d, P) -- left to XLA so the
    # bias add and downstream slicing/reshapes fuse (CostEstimate below lets
    # XLA overlap it with the kernel).
    params = jnp.dot(pro_features, w_dyn,
                     preferred_element_type=jnp.float32) + b_dyn        # (C, P)

    p1 = params[:, :num_params].reshape(C, d, dd)                       # (C,d,dd)
    p2 = params[:, num_params:2 * num_params].reshape(C, dd, d)         # (C,dd,d)
    p3 = params[:, 2 * num_params:].reshape(C, d)                       # (C, d)

    # Pack class axis into lanes for layer 1: (d, C*dd), columns c*dd+e = p1[c,:,e].
    p1_packed = jnp.transpose(p1, (1, 0, 2)).reshape(d, C * dd)

    # Block-diagonal layer-2 weight: (C*dd, C*d), diag block c is p2[c].
    eyeC = jnp.eye(C, dtype=params.dtype)
    p2_bd = (eyeC[:, None, :, None] * p2[:, :, None, :]).reshape(C * dd, C * d)

    # Block-diagonal layer-3 weight: (C*d, C), column c holds p3[c] in its block.
    p3_bd = (eyeC[:, None, :] * p3[:, :, None]).reshape(C * d, C)

    # LayerNorm affine params tiled into the packed layout.
    g1p = jnp.tile(g1.reshape(-1), C).reshape(1, C * dd).astype(jnp.float32)
    b1p = jnp.tile(b1.reshape(-1), C).reshape(1, C * dd).astype(jnp.float32)
    g2p = jnp.tile(g2.reshape(-1), C).reshape(1, C * d).astype(jnp.float32)
    b2p = jnp.tile(b2.reshape(-1), C).reshape(1, C * d).astype(jnp.float32)

    # Constant block-diagonal averaging matrices (segmented mean on the MXU).
    m1 = jnp.asarray(np.kron(np.eye(C, dtype=np.float32),
                             np.full((dd, dd), 1.0 / dd, np.float32)))
    m2 = jnp.asarray(np.kron(np.eye(C, dtype=np.float32),
                             np.full((d, d), 1.0 / d, np.float32)))

    # Flatten tokens: order (lay_n, bs, nb) matches the final .view in torch.
    x = query_outputs.reshape(lay_n * bs * nb, d)
    N = x.shape[0]

    # Token tile: big (amortize per-grid-step overhead) but capped so the grid
    # has >= 2 steps -> both v7x TensorCores get work on the "parallel" axis.
    tile = min(token_tile, _round_up8(pl.cdiv(N, 2)))
    tile = _round_up8(tile)
    n_pad = pl.cdiv(N, tile) * tile
    if n_pad != N:
        x = jnp.pad(x, ((0, n_pad - N), (0, 0)))
    grid = (n_pad // tile,)

    # bf16 matmul operands, f32 accumulation / LN math.
    x_bf = x.astype(jnp.bfloat16)
    p1_bf = p1_packed.astype(jnp.bfloat16)
    p2_bf = p2_bd.astype(jnp.bfloat16)
    p3_bf = p3_bd.astype(jnp.bfloat16)

    weight_bytes = (p1_bf.size + p2_bf.size + p3_bf.size) * 2 + \
                   (g1p.size + b1p.size + g2p.size + b2p.size +
                    m1.size + m2.size) * 4
    flops = 2 * n_pad * (d * C * dd            # layer 1
                         + C * dd * C * d      # layer 2 (block-diag as dense)
                         + C * d * C           # layer 3
                         + 2 * (C * dd) ** 2   # LN1 mean + var matmuls
                         + 2 * (C * d) ** 2)   # LN2 mean + var matmuls
    cost = pl.CostEstimate(
        flops=int(flops),
        transcendentals=int(n_pad * (C * dd + C * d)),     # rsqrt
        bytes_accessed=int(n_pad * d * 2 + n_pad * C * 4 + weight_bytes),
    )

    out = pl.pallas_call(
        csce_kernel,
        out_shape=jax.ShapeDtypeStruct((n_pad, C), jnp.float32),
        grid=grid,
        in_specs=[
            pl.BlockSpec((tile, d), lambda i: (i, 0)),
            # Weights / constants: full arrays, constant index maps -> DMA'd
            # once, VMEM-resident across all token tiles.
            pl.BlockSpec((d, C * dd), lambda i: (0, 0)),
            pl.BlockSpec((C * dd, C * d), lambda i: (0, 0)),
            pl.BlockSpec((C * d, C), lambda i: (0, 0)),
            pl.BlockSpec((1, C * dd), lambda i: (0, 0)),
            pl.BlockSpec((1, C * dd), lambda i: (0, 0)),
            pl.BlockSpec((1, C * d), lambda i: (0, 0)),
            pl.BlockSpec((1, C * d), lambda i: (0, 0)),
            pl.BlockSpec((C * dd, C * dd), lambda i: (0, 0)),
            pl.BlockSpec((C * d, C * d), lambda i: (0, 0)),
        ],
        out_specs=pl.BlockSpec((tile, C), lambda i: (i, 0)),
        compiler_params=pltpu.CompilerParams(
            dimension_semantics=("parallel",)),
        cost_estimate=cost,
    )(x_bf, p1_bf, p2_bf, p3_bf, g1p, b1p, g2p, b2p, m1, m2)

    return out[:N].reshape(lay_n, bs, nb, C)


# ----------------------------------------------------------------------------
# Pure-JAX reference (mirrors the PyTorch forward exactly, f32)
# ----------------------------------------------------------------------------
def _layernorm(x, g, b):
    mu = jnp.mean(x, axis=-1, keepdims=True)
    var = jnp.mean((x - mu) ** 2, axis=-1, keepdims=True)
    return (x - mu) * jax.lax.rsqrt(var + EPS) * g + b


def csce_ref(query_outputs, pro_features, w_dyn, b_dyn, g1, b1, g2, b2,
             hidden_dim, dim_dynamic):
    lay_n, bs, nb, d = query_outputs.shape
    C = pro_features.shape[0]
    num_params = hidden_dim * dim_dynamic
    params = pro_features @ w_dyn + b_dyn                       # (C, P)
    p1 = params[:, :num_params].reshape(C, d, dim_dynamic)
    p2 = params[:, num_params:2 * num_params].reshape(C, dim_dynamic, d)
    p3 = params[:, 2 * num_params:].reshape(C, d, 1)

    feats = query_outputs.reshape(lay_n * bs, nb, d).transpose(1, 0, 2)
    f = jnp.einsum('nbd,cde->nbce', feats, p1)
    f = jnp.maximum(_layernorm(f, g1, b1), 0.0)
    f = jnp.einsum('nbce,ced->nbcd', f, p2)
    f = jnp.maximum(_layernorm(f, g2, b2), 0.0)
    f = jnp.einsum('nbcd,cde->nbce', f, p3)[..., 0]             # (nb, B, C)
    return f.transpose(1, 0, 2).reshape(lay_n, bs, nb, C)


# ----------------------------------------------------------------------------
if __name__ == "__main__":
    hidden_dim = 32      # d_model
    dim_dynamic = 8
    num_dynamic = 2      # the module's slicing only makes sense for 2
    num_classes = 4
    lay_n, bs, nb = 2, 2, 16

    num_params = hidden_dim * dim_dynamic
    P = num_dynamic * num_params + hidden_dim                   # linear out dim

    key = jax.random.PRNGKey(0)
    k1, k2, k3, k4 = jax.random.split(key, 4)

    # inputs
    query_outputs = jax.random.normal(k1, (lay_n, bs, nb, hidden_dim),
                                      dtype=jnp.float32)
    pro_features = jax.random.normal(k2, (num_classes, hidden_dim),
                                     dtype=jnp.float32)

    # deterministic synthetic parameters (nn.Linear weight stored transposed)
    w_dyn = jax.random.normal(k3, (hidden_dim, P), dtype=jnp.float32) * 0.05
    b_dyn = jax.random.normal(k4, (P,), dtype=jnp.float32) * 0.05
    g1 = jnp.ones((dim_dynamic,), jnp.float32)   # LayerNorm defaults
    b1 = jnp.zeros((dim_dynamic,), jnp.float32)
    g2 = jnp.ones((hidden_dim,), jnp.float32)
    b2 = jnp.zeros((hidden_dim,), jnp.float32)

    fwd = jax.jit(functools.partial(csce_forward,
                                    hidden_dim=hidden_dim,
                                    dim_dynamic=dim_dynamic))
    out = fwd(query_outputs, pro_features, w_dyn, b_dyn, g1, b1, g2, b2)
    out = jax.block_until_ready(out)

    ref = csce_ref(query_outputs, pro_features, w_dyn, b_dyn, g1, b1, g2, b2,
                   hidden_dim, dim_dynamic)

    assert out.shape == (lay_n, bs, nb, num_classes), out.shape
    # bf16 matmul operands (f32 accumulation) vs f32 reference -> loosened tol.
    np.testing.assert_allclose(np.asarray(out), np.asarray(ref),
                               rtol=2e-2, atol=2e-2)
    print("KERNEL_OK")
</pallas_src>

<mosaic_0001>
module attributes {stable_mosaic.version = 11 : i64} {
  func.func @csce_kernel(%arg0: i32, %arg1: memref<32x32xbf16, #tpu.memory_space<vmem>>, %arg2: memref<32x32xbf16, #tpu.memory_space<vmem>>, %arg3: memref<32x128xbf16, #tpu.memory_space<vmem>>, %arg4: memref<128x4xbf16, #tpu.memory_space<vmem>>, %arg5: memref<1x32xf32, #tpu.memory_space<vmem>>, %arg6: memref<1x32xf32, #tpu.memory_space<vmem>>, %arg7: memref<1x128xf32, #tpu.memory_space<vmem>>, %arg8: memref<1x128xf32, #tpu.memory_space<vmem>>, %arg9: memref<32x32xf32, #tpu.memory_space<vmem>>, %arg10: memref<128x128xf32, #tpu.memory_space<vmem>>, %arg11: memref<32x4xf32, #tpu.memory_space<vmem>>) attributes {dimension_semantics = [#tpu.dimension_semantics<parallel>], iteration_bounds = array<i64: 2>, scalar_prefetch = 0 : i64, scratch_operands = 0 : i64, tpu.core_type = #tpu.core_type<tc>, window_params = [{transform_indices = @transform_0, window_bounds = array<i64: 32, 32>}, {pipeline_mode = #tpu.pipeline_mode<synchronous>, transform_indices = @transform_1, window_bounds = array<i64: 32, 32>}, {pipeline_mode = #tpu.pipeline_mode<synchronous>, transform_indices = @transform_2, window_bounds = array<i64: 32, 128>}, {pipeline_mode = #tpu.pipeline_mode<synchronous>, transform_indices = @transform_3, window_bounds = array<i64: 128, 4>}, {pipeline_mode = #tpu.pipeline_mode<synchronous>, transform_indices = @transform_4, window_bounds = array<i64: 1, 32>}, {pipeline_mode = #tpu.pipeline_mode<synchronous>, transform_indices = @transform_5, window_bounds = array<i64: 1, 32>}, {pipeline_mode = #tpu.pipeline_mode<synchronous>, transform_indices = @transform_6, window_bounds = array<i64: 1, 128>}, {pipeline_mode = #tpu.pipeline_mode<synchronous>, transform_indices = @transform_7, window_bounds = array<i64: 1, 128>}, {pipeline_mode = #tpu.pipeline_mode<synchronous>, transform_indices = @transform_8, window_bounds = array<i64: 32, 32>}, {pipeline_mode = #tpu.pipeline_mode<synchronous>, transform_indices = @transform_9, window_bounds = array<i64: 128, 128>}, {transform_indices = @transform_10, window_bounds = array<i64: 32, 4>}]} {
    %c0 = arith.constant 0 : index
    %c0_0 = arith.constant 0 : index
    %0 = vector.load %arg1[%c0, %c0_0] : memref<32x32xbf16, #tpu.memory_space<vmem>>, vector<32x32xbf16>
    %c0_1 = arith.constant 0 : index
    %c0_2 = arith.constant 0 : index
    %1 = vector.load %arg2[%c0_1, %c0_2] : memref<32x32xbf16, #tpu.memory_space<vmem>>, vector<32x32xbf16>
    %cst = arith.constant dense<0.000000e+00> : vector<32x32xf32>
    %2 = tpu.matmul %0, %1, %cst {dimension_numbers = #tpu.dot_dimension_numbers<[1], [0], [0], [1], [0, 0, 1, 1], [], []>} : vector<32x32xbf16>, vector<32x32xbf16>, vector<32x32xf32> -> vector<32x32xf32>
    %c0_3 = arith.constant 0 : index
    %c0_4 = arith.constant 0 : index
    %3 = vector.load %arg9[%c0_3, %c0_4] : memref<32x32xf32, #tpu.memory_space<vmem>>, vector<32x32xf32>
    %cst_5 = arith.constant dense<0.000000e+00> : vector<32x32xf32>
    %4 = tpu.matmul %2, %3, %cst_5 {dimension_numbers = #tpu.dot_dimension_numbers<[1], [0], [0], [1], [0, 0, 1, 1], [], []>} : vector<32x32xf32>, vector<32x32xf32>, vector<32x32xf32> -> vector<32x32xf32>
    %5 = arith.subf %2, %4 : vector<32x32xf32>
    %6 = arith.mulf %5, %5 : vector<32x32xf32>
    %cst_6 = arith.constant dense<0.000000e+00> : vector<32x32xf32>
    %7 = tpu.matmul %6, %3, %cst_6 {dimension_numbers = #tpu.dot_dimension_numbers<[1], [0], [0], [1], [0, 0, 1, 1], [], []>} : vector<32x32xf32>, vector<32x32xf32>, vector<32x32xf32> -> vector<32x32xf32>
    %cst_7 = arith.constant 9.99999974E-6 : f32
    %8 = vector.broadcast %cst_7 : f32 to vector<32x32xf32>
    %9 = arith.addf %7, %8 : vector<32x32xf32>
    %10 = math.rsqrt %9 : vector<32x32xf32>
    %11 = arith.mulf %5, %10 : vector<32x32xf32>
    %c0_8 = arith.constant 0 : index
    %c0_9 = arith.constant 0 : index
    %12 = vector.load %arg5[%c0_8, %c0_9] : memref<1x32xf32, #tpu.memory_space<vmem>>, vector<1x32xf32>
    %13 = vector.broadcast %12 : vector<1x32xf32> to vector<32x32xf32>
    %14 = arith.mulf %11, %13 : vector<32x32xf32>
    %c0_10 = arith.constant 0 : index
    %c0_11 = arith.constant 0 : index
    %15 = vector.load %arg6[%c0_10, %c0_11] : memref<1x32xf32, #tpu.memory_space<vmem>>, vector<1x32xf32>
    %16 = vector.broadcast %15 : vector<1x32xf32> to vector<32x32xf32>
    %17 = arith.addf %14, %16 : vector<32x32xf32>
    %cst_12 = arith.constant 0.000000e+00 : f32
    %18 = vector.broadcast %cst_12 : f32 to vector<32x32xf32>
    %19 = arith.maximumf %17, %18 : vector<32x32xf32>
    %20 = arith.truncf %19 : vector<32x32xf32> to vector<32x32xbf16>
    %c0_13 = arith.constant 0 : index
    %c0_14 = arith.constant 0 : index
    %21 = vector.load %arg3[%c0_13, %c0_14] : memref<32x128xbf16, #tpu.memory_space<vmem>>, vector<32x128xbf16>
    %cst_15 = arith.constant dense<0.000000e+00> : vector<32x128xf32>
    %22 = tpu.matmul %20, %21, %cst_15 {dimension_numbers = #tpu.dot_dimension_numbers<[1], [0], [0], [1], [0, 0, 1, 1], [], []>} : vector<32x32xbf16>, vector<32x128xbf16>, vector<32x128xf32> -> vector<32x128xf32>
    %c0_16 = arith.constant 0 : index
    %c0_17 = arith.constant 0 : index
    %23 = vector.load %arg10[%c0_16, %c0_17] : memref<128x128xf32, #tpu.memory_space<vmem>>, vector<128x128xf32>
    %cst_18 = arith.constant dense<0.000000e+00> : vector<32x128xf32>
    %24 = tpu.matmul %22, %23, %cst_18 {dimension_numbers = #tpu.dot_dimension_numbers<[1], [0], [0], [1], [0, 0, 1, 1], [], []>} : vector<32x128xf32>, vector<128x128xf32>, vector<32x128xf32> -> vector<32x128xf32>
    %25 = arith.subf %22, %24 : vector<32x128xf32>
    %26 = arith.mulf %25, %25 : vector<32x128xf32>
    %cst_19 = arith.constant dense<0.000000e+00> : vector<32x128xf32>
    %27 = tpu.matmul %26, %23, %cst_19 {dimension_numbers = #tpu.dot_dimension_numbers<[1], [0], [0], [1], [0, 0, 1, 1], [], []>} : vector<32x128xf32>, vector<128x128xf32>, vector<32x128xf32> -> vector<32x128xf32>
    %cst_20 = arith.constant 9.99999974E-6 : f32
    %28 = vector.broadcast %cst_20 : f32 to vector<32x128xf32>
    %29 = arith.addf %27, %28 : vector<32x128xf32>
    %30 = math.rsqrt %29 : vector<32x128xf32>
    %31 = arith.mulf %25, %30 : vector<32x128xf32>
    %c0_21 = arith.constant 0 : index
    %c0_22 = arith.constant 0 : index
    %32 = vector.load %arg7[%c0_21, %c0_22] : memref<1x128xf32, #tpu.memory_space<vmem>>, vector<1x128xf32>
    %33 = vector.broadcast %32 : vector<1x128xf32> to vector<32x128xf32>
    %34 = arith.mulf %31, %33 : vector<32x128xf32>
    %c0_23 = arith.constant 0 : index
    %c0_24 = arith.constant 0 : index
    %35 = vector.load %arg8[%c0_23, %c0_24] : memref<1x128xf32, #tpu.memory_space<vmem>>, vector<1x128xf32>
    %36 = vector.broadcast %35 : vector<1x128xf32> to vector<32x128xf32>
    %37 = arith.addf %34, %36 : vector<32x128xf32>
    %cst_25 = arith.constant 0.000000e+00 : f32
    %38 = vector.broadcast %cst_25 : f32 to vector<32x128xf32>
    %39 = arith.maximumf %37, %38 : vector<32x128xf32>
    %40 = arith.truncf %39 : vector<32x128xf32> to vector<32x128xbf16>
    %c0_26 = arith.constant 0 : index
    %c0_27 = arith.constant 0 : index
    %41 = vector.load %arg4[%c0_26, %c0_27] : memref<128x4xbf16, #tpu.memory_space<vmem>>, vector<128x4xbf16>
    %cst_28 = arith.constant dense<0.000000e+00> : vector<32x4xf32>
    %42 = tpu.matmul %40, %41, %cst_28 {dimension_numbers = #tpu.dot_dimension_numbers<[1], [0], [0], [1], [0, 0, 1, 1], [], []>} : vector<32x128xbf16>, vector<128x4xbf16>, vector<32x4xf32> -> vector<32x4xf32>
    %c0_29 = arith.constant 0 : index
    %c0_30 = arith.constant 0 : index
    %43 = vector.load %arg11[%c0_29, %c0_30] : memref<32x4xf32, #tpu.memory_space<vmem>>, vector<32x4xf32>
    tpu.vector_store %arg11[%c0_29, %c0_30], %42 {strides = array<i32>} : memref<32x4xf32, #tpu.memory_space<vmem>>, vector<32x4xf32>,
    return
  }
  func.func @transform_0(%arg0: i32) -> (i32, i32) {
    %c0_i32 = arith.constant 0 : i32
    %c0_i32_0 = arith.constant 0 : i32
    return %arg0, %c0_i32 : i32, i32
  }
  func.func @transform_1(%arg0: i32) -> (i32, i32) {
    %c0_i32 = arith.constant 0 : i32
    %c0_i32_0 = arith.constant 0 : i32
    %c0_i32_1 = arith.constant 0 : i32
    return %c0_i32, %c0_i32_0 : i32, i32
  }
  func.func @transform_2(%arg0: i32) -> (i32, i32) {
    %c0_i32 = arith.constant 0 : i32
    %c0_i32_0 = arith.constant 0 : i32
    %c0_i32_1 = arith.constant 0 : i32
    return %c0_i32, %c0_i32_0 : i32, i32
  }
  func.func @transform_3(%arg0: i32) -> (i32, i32) {
    %c0_i32 = arith.constant 0 : i32
    %c0_i32_0 = arith.constant 0 : i32
    %c0_i32_1 = arith.constant 0 : i32
    return %c0_i32, %c0_i32_0 : i32, i32
  }
  func.func @transform_4(%arg0: i32) -> (i32, i32) {
    %c0_i32 = arith.constant 0 : i32
    %c0_i32_0 = arith.constant 0 : i32
    %c0_i32_1 = arith.constant 0 : i32
    return %c0_i32, %c0_i32_0 : i32, i32
  }
  func.func @transform_5(%arg0: i32) -> (i32, i32) {
    %c0_i32 = arith.constant 0 : i32
    %c0_i32_0 = arith.constant 0 : i32
    %c0_i32_1 = arith.constant 0 : i32
    return %c0_i32, %c0_i32_0 : i32, i32
  }
  func.func @transform_6(%arg0: i32) -> (i32, i32) {
    %c0_i32 = arith.constant 0 : i32
    %c0_i32_0 = arith.constant 0 : i32
    %c0_i32_1 = arith.constant 0 : i32
    return %c0_i32, %c0_i32_0 : i32, i32
  }
  func.func @transform_7(%arg0: i32) -> (i32, i32) {
    %c0_i32 = arith.constant 0 : i32
    %c0_i32_0 = arith.constant 0 : i32
    %c0_i32_1 = arith.constant 0 : i32
    return %c0_i32, %c0_i32_0 : i32, i32
  }
  func.func @transform_8(%arg0: i32) -> (i32, i32) {
    %c0_i32 = arith.constant 0 : i32
    %c0_i32_0 = arith.constant 0 : i32
    %c0_i32_1 = arith.constant 0 : i32
    return %c0_i32, %c0_i32_0 : i32, i32
  }
  func.func @transform_9(%arg0: i32) -> (i32, i32) {
    %c0_i32 = arith.constant 0 : i32
    %c0_i32_0 = arith.constant 0 : i32
    %c0_i32_1 = arith.constant 0 : i32
    return %c0_i32, %c0_i32_0 : i32, i32
  }
  func.func @transform_10(%arg0: i32) -> (i32, i32) {
    %c0_i32 = arith.constant 0 : i32
    %c0_i32_0 = arith.constant 0 : i32
    return %arg0, %c0_i32 : i32, i32
  }
}

</mosaic_0001>

<llo_original>
// kernel: mul.18
$region0: #{mul.18}
  %s0 = inlined_call_operand.vmem [shape: f32[4,256], index: 0, kind: input, shape index: {}]
  %s1 = inlined_call_operand.vmem [shape: f32[4,8,32], index: 1, kind: output, shape index: {}]
  $region1: #{mul.18} parent=0
    #allocation0 [shape = 'u8[8192]{0}', space=vmem, size = 0x2000, scoped, tag = 'scoped mem for input reshape']
    %s3 = sshll.u32 1, 4
    %s4 = ssub.s32 %s3, 1
    %s5 = scalar_lea.vmem %s0, 4
    %v6 = vld [vmem:[%s5] sm:%s4]
    %s7 = scalar_lea.vmem [#allocation0], 8
    %8 = vst [vmem:[%s7] sm:%s4] %v6
    %v9 = vld [vmem:[%s0] sm:%s4]
    %10 = vst [vmem:[#allocation0] sm:%s4] %v9
    %v11 = vld [vmem:[#allocation0] sm:$0xf]
    %vm12 = vcmask 261120
    %13 = vst.msk [vmem:[%s1] ss:$8 sm:$0xf] %vm12, %v11
    %s14 = scalar_lea.vmem [#allocation0], 8
    %v15 = vld [vmem:[%s14] sm:$0xf]
    %vm16 = vcmask 261120
    %s17 = scalar_lea.vmem %s1, 4
    %18 = vst.msk [vmem:[%s17] ss:$8 sm:$0xf] %vm16, %v15
    %v19 = vld.sshfl [vmem:[#allocation0] sm:$0xff pattern:$0xb3a29180]
    %20 = vrot.lane.b32.xlu0 %v19, 96
    %v21 = vpop.permute.xlu0 %20
    %vm22 = vcmask 261120
    %s23 = scalar_lea.vmem %s1, 1
    %24 = vst.msk [vmem:[%s23] ss:$4 sm:$0xff] %vm22, %v21
    %v25 = vld.sshfl [vmem:[#allocation0] sm:$0xff pattern:$0xb3a29180]
    %26 = vrot.lane.b32.xlu0 %v25, 64
    %v27 = vpop.permute.xlu0 %26
    %vm28 = vcmask 261120
    %s29 = scalar_lea.vmem %s1, 2
    %30 = vst.msk [vmem:[%s29] ss:$4 sm:$0xff] %vm28, %v27
    %v31 = vld.sshfl [vmem:[#allocation0] sm:$0xff pattern:$0xb3a29180]
    %32 = vrot.lane.b32.xlu0 %v31, 32
    %v33 = vpop.permute.xlu0 %32
    %vm34 = vcmask 261120
    %s35 = scalar_lea.vmem %s1, 3
    %36 = vst.msk [vmem:[%s35] ss:$4 sm:$0xff] %vm34, %v33

// kernel: tile.23
$region0: #{tile.23}
  #allocation0 [shape = 's32[1]{0}', space=sflag, size = 0x4, scoped, tag = 'scoped memory for tile.23']
  %s0 = inlined_call_operand.vmem [shape: f32[8], index: 0, kind: input, shape index: {}]
  %s1 = inlined_call_operand.vmem [shape: f32[4,8], index: 1, kind: output, shape index: {}]
  // Predicated region
  $region2: #{tile.23} parent=0 // pred_check
    _
  $region3: #{tile.23} parent=0 // pred_check_branch
    %3 = sbr.rel (0) target = $region5
  $region4: #{tile.23} parent=0 // pred_region
    _
  $region5: #{tile.23} parent=0 // pred_fallthru
    _
  %v4 = vld [vmem:[%s0] ss:$0 sm:$0xff]
  %5 = vst [vmem:[%s1] sm:$0xf] %v4

// kernel: tile.24
$region0: #{tile.24}
  %s0 = inlined_call_operand.vmem [shape: f32[4,8], index: 0, kind: input, shape index: {}]
  %s1 = inlined_call_operand.vmem [shape: f32[1,32], index: 1, kind: output, shape index: {}]
  $region1: #{tile.24} parent=0
    #allocation0 [shape = 'u8[4096]{0}', space=vmem, size = 0x1000, scoped, tag = 'scoped mem for output reshape']
    #allocation1 [shape = 'u8[4096]{0}', space=vmem, size = 0x1000, scoped, tag = 'scoped mem for input reshape']
    %s3 = sshll.u32 1, 4
    %s4 = ssub.s32 %s3, 1
    %v5 = vld [vmem:[%s0] sm:%s4]
    %6 = vst [vmem:[#allocation1] sm:%s4] %v5
    %v7 = vld [vmem:[#allocation1] sm:$0x1]
    %vm8 = vcmask 64512
    %9 = vst.msk [vmem:[#allocation0] sm:$0x1] %vm8, %v7
    %s10 = scalar_lea.vmem [#allocation1], 3
    %v11 = vld [vmem:[%s10] sm:$0x1]
    %12 = vrot.lane.b32.xlu0 %v11, 24
    %v13 = vpop.permute.xlu0 %12
    %vm14 = vcmask 261312
    %15 = vst.msk [vmem:[#allocation0] sm:$0x1] %vm14, %v13
    %s16 = scalar_lea.vmem [#allocation1], 2
    %v17 = vld [vmem:[%s16] sm:$0x1]
    %18 = vrot.lane.b32.xlu0 %v17, 16
    %v19 = vpop.permute.xlu0 %18
    %vm20 = vcmask 195712
    %21 = vst.msk [vmem:[#allocation0] sm:$0x1] %vm20, %v19
    %s22 = scalar_lea.vmem [#allocation1], 1
    %v23 = vld [vmem:[%s22] sm:$0x1]
    %24 = vrot.lane.b32.xlu0 %v23, 8
    %v25 = vpop.permute.xlu0 %24
    %vm26 = vcmask 130112
    %27 = vst.msk [vmem:[#allocation0] sm:$0x1] %vm26, %v25
    %s29 = sshll.u32 1, 1
    %s30 = ssub.s32 %s29, 1
    %v32 = vld [vmem:[#allocation0] sm:%s30]
    %s33 = sshll.u32 1, 1
    %s34 = ssub.s32 %s33, 1
    %35 = vst [vmem:[%s1] sm:%s34] %v32

// kernel: tile.33
$region0: #{tile.33}
  #allocation0 [shape = 's32[1]{0}', space=sflag, size = 0x4, scoped, tag = 'scoped memory for tile.33']
  %s0 = inlined_call_operand.vmem [shape: f32[32], index: 0, kind: input, shape index: {}]
  %s1 = inlined_call_operand.vmem [shape: f32[4,32], index: 1, kind: output, shape index: {}]
  // Predicated region
  $region2: #{tile.33} parent=0 // pred_check
    _
  $region3: #{tile.33} parent=0 // pred_check_branch
    %3 = sbr.rel (0) target = $region5
  $region4: #{tile.33} parent=0 // pred_region
    _
  $region5: #{tile.33} parent=0 // pred_fallthru
    _
  %v4 = vld [vmem:[%s0] ss:$0 sm:$0xff]
  %5 = vst [vmem:[%s1] sm:$0xf] %v4

// kernel: tile.34
$region0: #{tile.34}
  %s0 = inlined_call_operand.vmem [shape: f32[4,32], index: 0, kind: input, shape index: {}]
  %s1 = inlined_call_operand.vmem [shape: f32[1,128], index: 1, kind: output, shape index: {}]
  $region1: #{tile.34} parent=0
    #allocation0 [shape = 'u8[4096]{0}', space=vmem, size = 0x1000, scoped, tag = 'scoped mem for output reshape']
    #allocation1 [shape = 'u8[4096]{0}', space=vmem, size = 0x1000, scoped, tag = 'scoped mem for input reshape']
    %s3 = sshll.u32 1, 4
    %s4 = ssub.s32 %s3, 1
    %v5 = vld [vmem:[%s0] sm:%s4]
    %6 = vst [vmem:[#allocation1] sm:%s4] %v5
    %v7 = vld [vmem:[#allocation1] sm:$0x1]
    %vm8 = vcmask 261120
    %9 = vst.msk [vmem:[#allocation0] sm:$0x1] %vm8, %v7
    %s10 = scalar_lea.vmem [#allocation1], 3
    %v11 = vld [vmem:[%s10] sm:$0x1]
    %12 = vrot.lane.b32.xlu0 %v11, 96
    %v13 = vpop.permute.xlu0 %12
    %vm14 = vcmask 1048320
    %15 = vst.msk [vmem:[#allocation0] sm:$0x1] %vm14, %v13
    %s16 = scalar_lea.vmem [#allocation1], 2
    %v17 = vld [vmem:[%s16] sm:$0x1]
    %18 = vrot.lane.b32.xlu0 %v17, 64
    %v19 = vpop.permute.xlu0 %18
    %vm20 = vcmask 785920
    %21 = vst.msk [vmem:[#allocation0] sm:$0x1] %vm20, %v19
    %s22 = scalar_lea.vmem [#allocation1], 1
    %v23 = vld [vmem:[%s22] sm:$0x1]
    %24 = vrot.lane.b32.xlu0 %v23, 32
    %v25 = vpop.permute.xlu0 %24
    %vm26 = vcmask 523520
    %27 = vst.msk [vmem:[#allocation0] sm:$0x1] %vm26, %v25
    %s29 = sshll.u32 1, 1
    %s30 = ssub.s32 %s29, 1
    %v32 = vld [vmem:[#allocation0] sm:%s30]
    %s33 = sshll.u32 1, 1
    %s34 = ssub.s32 %s33, 1
    %35 = vst [vmem:[%s1] sm:%s34] %v32

// kernel: csce_forward.1
$region0: #{csce_forward.1}
  #allocation0 [shape = 'u32[]', space=smem, size = 0x4, offset = 0x4, fixed_abs, tag = 'smem constant byte address 0x4 - core index']
  #allocation1 [shape = 'u32[144,128]{1,0:T(1,128)}', space=vmem, size = 0x12000, scoped, tag = 'internal scratch']
  %s0 = inlined_call_operand.vmem [shape: bf16[64,32], index: 0, kind: input, shape index: {}]
  %s1 = inlined_call_operand.vmem [shape: bf16[32,32], index: 1, kind: input, shape index: {}]
  %s2 = inlined_call_operand.vmem [shape: bf16[32,128], index: 2, kind: input, shape index: {}]
  %s3 = inlined_call_operand.vmem [shape: bf16[128,4], index: 3, kind: input, shape index: {}]
  %s4 = inlined_call_operand.vmem [shape: f32[1,32], index: 4, kind: input, shape index: {}]
  %s5 = inlined_call_operand.vmem [shape: f32[1,32], index: 5, kind: input, shape index: {}]
  %s6 = inlined_call_operand.vmem [shape: f32[1,128], index: 6, kind: input, shape index: {}]
  %s7 = inlined_call_operand.vmem [shape: f32[1,128], index: 7, kind: input, shape index: {}]
  %s8 = inlined_call_operand.vmem [shape: f32[32,32], index: 8, kind: input, shape index: {}]
  %s9 = inlined_call_operand.vmem [shape: f32[128,128], index: 9, kind: input, shape index: {}]
  %s10 = inlined_call_operand.vmem [shape: f32[64,4], index: 10, kind: output, shape index: {}]
  %s11 = sld [smem:[#allocation0]]
  $region73: #{csce_forward.1} parent=0
    _
  %s13 = ssub.s32 1, %s11
  %s14 = scalar_select 0, %s13, %s11
  loop: start=0, step=1, limit=4
  $region2: #{csce_forward.1} parent=0 // loop_pre_header
    _
  $region3: #{csce_forward.1} parent=0 // loop_header
    %s16 = sphi 0, %s20
    %p17 = scmp.ge.s32.totalorder %s16, 4
    %s26 = sphi 0, %s28
    %s29 = sphi 0, %s26
    %s30 = sphi 0, %s29
    %s46 = sphi 0, %s30
    %s50 = sphi 0, %s50
    %s52 = sphi 0, %s50
    %s53 = sphi 0, %s52
    %s67 = sphi 0, %s53
    %s71 = sphi 0, %s71
    %s73 = sphi 0, %s71
    %s74 = sphi 0, %s73
    %s88 = sphi 0, %s74
    %s92 = sphi 0, %s92
    %s94 = sphi 0, %s92
    %s95 = sphi 0, %s94
    %s109 = sphi 0, %s95
    %s113 = sphi 0, %s113
    %s115 = sphi 0, %s113
    %s116 = sphi 0, %s115
    %s130 = sphi 0, %s116
    %s134 = sphi 0, %s134
    %s136 = sphi 0, %s134
    %s137 = sphi 0, %s136
    %s151 = sphi 0, %s137
    %s155 = sphi 0, %s155
    %s157 = sphi 0, %s155
    %s158 = sphi 0, %s157
    %s172 = sphi 0, %s158
    %s176 = sphi 0, %s176
    %s178 = sphi 0, %s176
    %s179 = sphi 0, %s178
    %s193 = sphi 0, %s179
    %s197 = sphi 0, %s197
    %s199 = sphi 0, %s197
    %s200 = sphi 0, %s199
    %s214 = sphi 0, %s200
    %s218 = sphi 0, %s218
    %s220 = sphi 0, %s218
    %s221 = sphi 0, %s220
    %s235 = sphi 0, %s221
    %s241 = sphi 0, %s243
    %s244 = sphi 0, %s241
    %s245 = sphi 0, %s244
    %s261 = sphi 0, %s245
  $region4: #{csce_forward.1} parent=0 // loop_header_branch
    %19 = sbr.rel (%p17) target = $region8
  $region5: #{csce_forward.1} parent=0 // loop_body
    %s21 = ssub.s32 %s16, 1
    %s22 = ssub.s32 %s16, 2
    %s23 = sadd.s32 %s16, 1
    %s24 = ssub.s32 %s16, %s23
    %p25 = scmp.eq.s32.totalorder %s24, 0
    %s27 = sadd.s32 %s26, 1
    %s28 = scalar_select %p25, %s26, %s27
    %p31 = pneg %p25
    %p32 = scmp.eq.s32.totalorder %s16, 1
    %p33 = por %p31, %p32
    %p34 = scmp.ne.s32.totalorder %s26, %s29
    %p35 = scmp.eq.s32.totalorder %s16, 0
    %p36 = por %p34, %p35
    %p37 = scmp.ne.s32.totalorder %s26, %s29
    %p38 = scmp.eq.s32.totalorder %s21, 1
    %p39 = por %p37, %p38
    %p40 = scmp.ne.s32.totalorder %s29, %s30
    %p41 = scmp.eq.s32.totalorder %s21, 0
    %p42 = por %p40, %p41
    %p43 = scmp.ne.s32.totalorder %s29, %s30
    %p44 = scmp.eq.s32.totalorder %s22, 1
    %p45 = por %p43, %p44
    %p47 = scmp.ne.s32.totalorder %s30, %s46
    %p48 = scmp.eq.s32.totalorder %s22, 0
    %p49 = por %p47, %p48
    %s51 = sadd.s32 %s50, 1
    %p54 = scmp.eq.s32.totalorder %s16, 1
    %p55 = scmp.ne.s32.totalorder %s50, %s52
    %p56 = scmp.eq.s32.totalorder %s16, 0
    %p57 = por %p55, %p56
    %p58 = scmp.ne.s32.totalorder %s50, %s52
    %p59 = scmp.eq.s32.totalorder %s21, 1
    %p60 = por %p58, %p59
    %p61 = scmp.ne.s32.totalorder %s52, %s53
    %p62 = scmp.eq.s32.totalorder %s21, 0
    %p63 = por %p61, %p62
    %p64 = scmp.ne.s32.totalorder %s52, %s53
    %p65 = scmp.eq.s32.totalorder %s22, 1
    %p66 = por %p64, %p65
    %p68 = scmp.ne.s32.totalorder %s53, %s67
    %p69 = scmp.eq.s32.totalorder %s22, 0
    %p70 = por %p68, %p69
    %s72 = sadd.s32 %s71, 1
    %p75 = scmp.eq.s32.totalorder %s16, 1
    %p76 = scmp.ne.s32.totalorder %s71, %s73
    %p77 = scmp.eq.s32.totalorder %s16, 0
    %p78 = por %p76, %p77
    %p79 = scmp.ne.s32.totalorder %s71, %s73
    %p80 = scmp.eq.s32.totalorder %s21, 1
    %p81 = por %p79, %p80
    %p82 = scmp.ne.s32.totalorder %s73, %s74
    %p83 = scmp.eq.s32.totalorder %s21, 0
    %p84 = por %p82, %p83
    %p85 = scmp.ne.s32.totalorder %s73, %s74
    %p86 = scmp.eq.s32.totalorder %s22, 1
    %p87 = por %p85, %p86
    %p89 = scmp.ne.s32.totalorder %s74, %s88
    %p90 = scmp.eq.s32.totalorder %s22, 0
    %p91 = por %p89, %p90
    %s93 = sadd.s32 %s92, 1
    %p96 = scmp.eq.s32.totalorder %s16, 1
    %p97 = scmp.ne.s32.totalorder %s92, %s94
    %p98 = scmp.eq.s32.totalorder %s16, 0
    %p99 = por %p97, %p98
    %p100 = scmp.ne.s32.totalorder %s92, %s94
    %p101 = scmp.eq.s32.totalorder %s21, 1
    %p102 = por %p100, %p101
    %p103 = scmp.ne.s32.totalorder %s94, %s95
    %p104 = scmp.eq.s32.totalorder %s21, 0
    %p105 = por %p103, %p104
    %p106 = scmp.ne.s32.totalorder %s94, %s95
    %p107 = scmp.eq.s32.totalorder %s22, 1
    %p108 = por %p106, %p107
    %p110 = scmp.ne.s32.totalorder %s95, %s109
    %p111 = scmp.eq.s32.totalorder %s22, 0
    %p112 = por %p110, %p111
    %s114 = sadd.s32 %s113, 1
    %p117 = scmp.eq.s32.totalorder %s16, 1
    %p118 = scmp.ne.s32.totalorder %s113, %s115
    %p119 = scmp.eq.s32.totalorder %s16, 0
    %p120 = por %p118, %p119
    %p121 = scmp.ne.s32.totalorder %s113, %s115
    %p122 = scmp.eq.s32.totalorder %s21, 1
    %p123 = por %p121, %p122
    %p124 = scmp.ne.s32.totalorder %s115, %s116
    %p125 = scmp.eq.s32.totalorder %s21, 0
    %p126 = por %p124, %p125
    %p127 = scmp.ne.s32.totalorder %s115, %s116
    %p128 = scmp.eq.s32.totalorder %s22, 1
    %p129 = por %p127, %p128
    %p131 = scmp.ne.s32.totalorder %s116, %s130
    %p132 = scmp.eq.s32.totalorder %s22, 0
    %p133 = por %p131, %p132
    %s135 = sadd.s32 %s134, 1
    %p138 = scmp.eq.s32.totalorder %s16, 1
    %p139 = scmp.ne.s32.totalorder %s134, %s136
    %p140 = scmp.eq.s32.totalorder %s16, 0
    %p141 = por %p139, %p140
    %p142 = scmp.ne.s32.totalorder %s134, %s136
    %p143 = scmp.eq.s32.totalorder %s21, 1
    %p144 = por %p142, %p143
    %p145 = scmp.ne.s32.totalorder %s136, %s137
    %p146 = scmp.eq.s32.totalorder %s21, 0
    %p147 = por %p145, %p146
    %p148 = scmp.ne.s32.totalorder %s136, %s137
    %p149 = scmp.eq.s32.totalorder %s22, 1
    %p150 = por %p148, %p149
    %p152 = scmp.ne.s32.totalorder %s137, %s151
    %p153 = scmp.eq.s32.totalorder %s22, 0
    %p154 = por %p152, %p153
    %s156 = sadd.s32 %s155, 1
    %p159 = scmp.eq.s32.totalorder %s16, 1
    %p160 = scmp.ne.s32.totalorder %s155, %s157
    %p161 = scmp.eq.s32.totalorder %s16, 0
    %p162 = por %p160, %p161
    %p163 = scmp.ne.s32.totalorder %s155, %s157
    %p164 = scmp.eq.s32.totalorder %s21, 1
    %p165 = por %p163, %p164
    %p166 = scmp.ne.s32.totalorder %s157, %s158
    %p167 = scmp.eq.s32.totalorder %s21, 0
    %p168 = por %p166, %p167
    %p169 = scmp.ne.s32.totalorder %s157, %s158
    %p170 = scmp.eq.s32.totalorder %s22, 1
    %p171 = por %p169, %p170
    %p173 = scmp.ne.s32.totalorder %s158, %s172
    %p174 = scmp.eq.s32.totalorder %s22, 0
    %p175 = por %p173, %p174
    %s177 = sadd.s32 %s176, 1
    %p180 = scmp.eq.s32.totalorder %s16, 1
    %p181 = scmp.ne.s32.totalorder %s176, %s178
    %p182 = scmp.eq.s32.totalorder %s16, 0
    %p183 = por %p181, %p182
    %p184 = scmp.ne.s32.totalorder %s176, %s178
    %p185 = scmp.eq.s32.totalorder %s21, 1
    %p186 = por %p184, %p185
    %p187 = scmp.ne.s32.totalorder %s178, %s179
    %p188 = scmp.eq.s32.totalorder %s21, 0
    %p189 = por %p187, %p188
    %p190 = scmp.ne.s32.totalorder %s178, %s179
    %p191 = scmp.eq.s32.totalorder %s22, 1
    %p192 = por %p190, %p191
    %p194 = scmp.ne.s32.totalorder %s179, %s193
    %p195 = scmp.eq.s32.totalorder %s22, 0
    %p196 = por %p194, %p195
    %s198 = sadd.s32 %s197, 1
    %p201 = scmp.eq.s32.totalorder %s16, 1
    %p202 = scmp.ne.s32.totalorder %s197, %s199
    %p203 = scmp.eq.s32.totalorder %s16, 0
    %p204 = por %p202, %p203
    %p205 = scmp.ne.s32.totalorder %s197, %s199
    %p206 = scmp.eq.s32.totalorder %s21, 1
    %p207 = por %p205, %p206
    %p208 = scmp.ne.s32.totalorder %s199, %s200
    %p209 = scmp.eq.s32.totalorder %s21, 0
    %p210 = por %p208, %p209
    %p211 = scmp.ne.s32.totalorder %s199, %s200
    %p212 = scmp.eq.s32.totalorder %s22, 1
    %p213 = por %p211, %p212
    %p215 = scmp.ne.s32.totalorder %s200, %s214
    %p216 = scmp.eq.s32.totalorder %s22, 0
    %p217 = por %p215, %p216
    %s219 = sadd.s32 %s218, 1
    %p222 = scmp.eq.s32.totalorder %s16, 1
    %p223 = scmp.ne.s32.totalorder %s218, %s220
    %p224 = scmp.eq.s32.totalorder %s16, 0
    %p225 = por %p223, %p224
    %p226 = scmp.ne.s32.totalorder %s218, %s220
    %p227 = scmp.eq.s32.totalorder %s21, 1
    %p228 = por %p226, %p227
    %p229 = scmp.ne.s32.totalorder %s220, %s221
    %p230 = scmp.eq.s32.totalorder %s21, 0
    %p231 = por %p229, %p230
    %p232 = scmp.ne.s32.totalorder %s220, %s221
    %p233 = scmp.eq.s32.totalorder %s22, 1
    %p234 = por %p232, %p233
    %p236 = scmp.ne.s32.totalorder %s221, %s235
    %p237 = scmp.eq.s32.totalorder %s22, 0
    %p238 = por %p236, %p237
    %s239 = ssub.s32 %s16, %s23
    %p240 = scmp.eq.s32.totalorder %s239, 0
    %s242 = sadd.s32 %s241, 1
    %s243 = scalar_select %p240, %s241, %s242
    %p246 = pneg %p240
    %p247 = scmp.eq.s32.totalorder %s16, 1
    %p248 = por %p246, %p247
    %p249 = scmp.ne.s32.totalorder %s241, %s244
    %p250 = scmp.eq.s32.totalorder %s16, 0
    %p251 = por %p249, %p250
    %p252 = scmp.ne.s32.totalorder %s241, %s244
    %p253 = scmp.eq.s32.totalorder %s21, 1
    %p254 = por %p252, %p253
    %p255 = scmp.ne.s32.totalorder %s244, %s245
    %p256 = scmp.eq.s32.totalorder %s21, 0
    %p257 = por %p255, %p256
    %p258 = scmp.ne.s32.totalorder %s244, %s245
    %p259 = scmp.eq.s32.totalorder %s22, 1
    %p260 = por %p258, %p259
    %p262 = scmp.ne.s32.totalorder %s245, %s261
    %p263 = scmp.eq.s32.totalorder %s22, 0
    %p264 = por %p262, %p263
    %p265 = scmp.le.s32.totalorder 1, %s16
    %p266 = scmp.lt.s32.totalorder %s16, 3
    %p267 = pnand %p265, %p266
    %p268 = pneg %p267
    // Predicated region
    $region9: #{csce_forward.1} parent=5 // pred_check
      _
    $region10: #{csce_forward.1} parent=5 // pred_check_branch
      %270 = sbr.rel (%p267) target = $region12
    $region11: #{csce_forward.1} parent=5 // pred_region
      %s271 = ssub.s32 %s16, 1
      // Predicated region
      $region13: #{csce_forward.1} parent=11 // pred_check
        %p272 = pneg %p63
      $region14: #{csce_forward.1} parent=11 // pred_check_branch
        %274 = sbr.rel (%p272) target = $region16
      $region15: #{csce_forward.1} parent=11 // pred_region
        _
      $region16: #{csce_forward.1} parent=11 // pred_fallthru
        _
      // Predicated region
      $region17: #{csce_forward.1} parent=11 // pred_check
        %p275 = pneg %p84
      $region18: #{csce_forward.1} parent=11 // pred_check_branch
        %277 = sbr.rel (%p275) target = $region20
      $region19: #{csce_forward.1} parent=11 // pred_region
        _
      $region20: #{csce_forward.1} parent=11 // pred_fallthru
        _
      // Predicated region
      $region21: #{csce_forward.1} parent=11 // pred_check
        %p278 = pneg %p105
      $region22: #{csce_forward.1} parent=11 // pred_check_branch
        %280 = sbr.rel (%p278) target = $region24
      $region23: #{csce_forward.1} parent=11 // pred_region
        _
      $region24: #{csce_forward.1} parent=11 // pred_fallthru
        _
      // Predicated region
      $region25: #{csce_forward.1} parent=11 // pred_check
        %p281 = pneg %p126
      $region26: #{csce_forward.1} parent=11 // pred_check_branch
        %283 = sbr.rel (%p281) target = $region28
      $region27: #{csce_forward.1} parent=11 // pred_region
        _
      $region28: #{csce_forward.1} parent=11 // pred_fallthru
        _
      // Predicated region
      $region29: #{csce_forward.1} parent=11 // pred_check
        %p284 = pneg %p147
      $region30: #{csce_forward.1} parent=11 // pred_check_branch
        %286 = sbr.rel (%p284) target = $region32
      $region31: #{csce_forward.1} parent=11 // pred_region
        _
      $region32: #{csce_forward.1} parent=11 // pred_fallthru
        _
      // Predicated region
      $region33: #{csce_forward.1} parent=11 // pred_check
        %p287 = pneg %p168
      $region34: #{csce_forward.1} parent=11 // pred_check_branch
        %289 = sbr.rel (%p287) target = $region36
      $region35: #{csce_forward.1} parent=11 // pred_region
        _
      $region36: #{csce_forward.1} parent=11 // pred_fallthru
        _
      // Predicated region
      $region37: #{csce_forward.1} parent=11 // pred_check
        %p290 = pneg %p189
      $region38: #{csce_forward.1} parent=11 // pred_check_branch
        %292 = sbr.rel (%p290) target = $region40
      $region39: #{csce_forward.1} parent=11 // pred_region
        _
      $region40: #{csce_forward.1} parent=11 // pred_fallthru
        _
      // Predicated region
      $region41: #{csce_forward.1} parent=11 // pred_check
        %p293 = pneg %p210
      $region42: #{csce_forward.1} parent=11 // pred_check_branch
        %295 = sbr.rel (%p293) target = $region44
      $region43: #{csce_forward.1} parent=11 // pred_region
        _
      $region44: #{csce_forward.1} parent=11 // pred_fallthru
        _
      // Predicated region
      $region45: #{csce_forward.1} parent=11 // pred_check
        %p296 = pneg %p231
      $region46: #{csce_forward.1} parent=11 // pred_check_branch
        %298 = sbr.rel (%p296) target = $region48
      $region47: #{csce_forward.1} parent=11 // pred_region
        _
      $region48: #{csce_forward.1} parent=11 // pred_fallthru
        _
    $region12: #{csce_forward.1} parent=5 // pred_fallthru
      _
    %p299 = scmp.lt.s32.totalorder %s16, 2
    // Predicated region
    $region49: #{csce_forward.1} parent=5 // pred_check
      %p300 = pneg %p299
    $region50: #{csce_forward.1} parent=5 // pred_check_branch
      %302 = sbr.rel (%p300) target = $region52
    $region51: #{csce_forward.1} parent=5 // pred_region
      // Predicated region
      $region53: #{csce_forward.1} parent=51 // pred_check
        %p303 = pneg %p36
      $region54: #{csce_forward.1} parent=51 // pred_check_branch
        %305 = sbr.rel (%p303) target = $region56
      $region55: #{csce_forward.1} parent=51 // pred_region
        %s306 = smul.u32 4, %s16
        %p307 = scmp.lt.s32.totalorder %s306, 7
        %s308 = scalar_select %p307, %s306, 7
        %s309 = smul.addr %s308, 4
        %s310 = scalar_lea.vmem %s0, %s309
        %s311 = smul.u32 4, %s16
      $region56: #{csce_forward.1} parent=51 // pred_fallthru
        _
    $region52: #{csce_forward.1} parent=5 // pred_fallthru
      _
    %p312 = scmp.le.s32.totalorder 1, %s16
    %p313 = scmp.lt.s32.totalorder %s16, 3
    %p314 = pnand %p312, %p313
    %p315 = pneg %p314
    // Predicated region
    $region57: #{csce_forward.1} parent=5 // pred_check
      _
    $region58: #{csce_forward.1} parent=5 // pred_check_branch
      %317 = sbr.rel (%p314) target = $region60
    $region59: #{csce_forward.1} parent=5 // pred_region
      %s318 = ssub.s32 %s16, 1
      %s319 = smul.u32 4, %s21
      %p320 = scmp.lt.s32.totalorder %s319, 7
      %s321 = scalar_select %p320, %s319, 7
      %s322 = smul.addr %s321, 4
      %s323 = scalar_lea.vmem %s0, %s322
      %p324 = pneg %p42
      %p325 = pneg %p39
      %p326 = pneg %p63
      %p327 = pneg %p60
      %p328 = pneg %p84
      %p329 = pneg %p81
      %p330 = pneg %p105
      %p331 = pneg %p102
      %p332 = pneg %p126
      %p333 = pneg %p123
      %p334 = pneg %p147
      %p335 = pneg %p144
      %p336 = pneg %p168
      %p337 = pneg %p165
      %p338 = pneg %p189
      %p339 = pneg %p186
      %p340 = pneg %p210
      %p341 = pneg %p207
      %p342 = pneg %p231
      %p343 = pneg %p228
      %p344 = pneg %p257
      %p345 = pneg %p254
      %s346 = smul.u32 4, %s21
      %p347 = scmp.lt.s32.totalorder %s346, 7
      %s348 = scalar_select %p347, %s346, 7
      %s349 = smul.addr %s348, 8
      %s350 = scalar_lea.vmem %s10, %s349
      %s351 = smul.u32 4, %s21
      %p352 = scmp.lt.s32.totalorder %s351, 7
      %s353 = scalar_select %p352, %s351, 7
      %s354 = smul.addr %s353, 4
      %s355 = scalar_lea.vmem %s0, %s354
      %s356 = smul.u32 4, %s21
      %s357 = smul.u32 4, %s21
      %p358 = scmp.lt.s32.totalorder %s357, 7
      %s359 = scalar_select %p358, %s357, 7
      %s360 = smul.addr %s359, 8
      %s361 = scalar_lea.vmem %s10, %s360
      %s362 = smul.u32 4, %s21
      %v364 = vld [vmem:[%s355] sm:$0xf]
      %v365 = vld [vmem:[%s355 + $0x4] sm:$0xf]
      %v366 = vld [vmem:[%s355 + $0x8] sm:$0xf]
      %v367 = vld [vmem:[%s355 + $0xc] sm:$0xf]
      %v368 = vld [vmem:[%s1] sm:$0xf]
      %v369 = vld [vmem:[%s1 + $0x4] sm:$0xf]
      %v370 = vld [vmem:[%s1 + $0x8] sm:$0xf]
      %v371 = vld [vmem:[%s1 + $0xc] sm:$0xf]
      %v376 = vunpack.c.l.b16 %v364
      %v377 = vunpack.c.l.b16 %v365
      %v378 = vunpack.c.l.b16 %v366
      %v379 = vunpack.c.l.b16 %v367
      %v380 = vpack.c.b16 %v377, %v376
      %v381 = vpack.c.b16 %v379, %v378
      %v386 = vunpack.c.l.b16 %v368
      %v387 = vunpack.c.l.b16 %v369
      %v388 = vunpack.c.l.b16 %v370
      %v389 = vunpack.c.l.b16 %v371
      %v390 = vpack.c.b16 %v387, %v386
      %v391 = vpack.c.b16 %v389, %v388
      %vm394 = vcmask 261120
      %v396 = vsel %vm394, %v380, 0
      %v399 = vsel %vm394, %v381, 0
      %401 = vmatprep.subr.bf16.mxu0 0
      %402 = vmatpush1.bf16.msra.mxu0 0
      %403 = vmatprep.subr.bf16.mxu0 0
      %404 = vmatpush1.bf16.msra.mxu0 0
      %405 = vmatprep.subr.bf16.mxu0 0
      %406 = vmatpush1.bf16.msra.mxu0 0
      %407 = vmatprep.subr.bf16.mxu0 0
      %408 = vmatpush1.bf16.msra.mxu0 0
      %409 = vmatprep.subr.bf16.mxu0 0
      %410 = vmatpush1.bf16.msra.mxu0 0
      %411 = vmatprep.subr.bf16.mxu0 0
      %412 = vmatpush1.bf16.msra.mxu0 0
      %413 = vmatprep.subr.bf16.mxu0 0
      %414 = vmatpush1.bf16.msra.mxu0 %v391
      %415 = vmatprep.subr.bf16.mxu0 0
      %416 = vmatpush1.bf16.msra.mxu0 %v390
      %417 = vmatprep.subr.bf16.mxu0 0
      %418 = vmatpush2.bf16.msra.mxu0 0
      %419 = vmatprep.subr.bf16.mxu0 0
      %420 = vmatpush2.bf16.msra.mxu0 0
      %421 = vmatprep.subr.bf16.mxu0 0
      %422 = vmatpush2.bf16.msra.mxu0 0
      %423 = vmatprep.subr.bf16.mxu0 0
      %424 = vmatpush2.bf16.msra.mxu0 0
      %425 = vmatprep.subr.bf16.mxu0 0
      %426 = vmatpush2.bf16.msra.mxu0 0
      %427 = vmatprep.subr.bf16.mxu0 0
      %428 = vmatpush2.bf16.msra.mxu0 0
      %429 = vmatprep.subr.bf16.mxu0 0
      %430 = vmatpush2.bf16.msra.mxu0 0
      %431 = vmatprep.subr.bf16.mxu0 0
      %432 = vmatpush2.bf16.msra.mxu0 0
      %433 = vmatprep.mubr.bf16.mxu0 0
      %434 = vmatmul.mubr.bf16.gmra.mxu0 %v396
      %v435 = vpop.f32.mrf.mxu0
      %v436 = vadd.f32 0.0, %v435
      %v437 = vpop.f32.mrf.mxu0
      %v438 = vpop.f32.mrf.mxu0
      %v439 = vadd.f32 0.0, %v438
      %v440 = vpop.f32.mrf.mxu0
      %441 = vmatprep.mubr.bf16.mxu0 0
      %442 = vmatmul.mubr.bf16.gmra.mxu0 %v399
      %v443 = vpop.f32.mrf.mxu0
      %v444 = vadd.f32 0.0, %v443
      %v445 = vpop.f32.mrf.mxu0
      %v446 = vpop.f32.mrf.mxu0
      %v447 = vadd.f32 0.0, %v446
      %v448 = vpop.f32.mrf.mxu0
      %449 = vdwg.mxu0
      %v450 = vld [vmem:[%s8] sm:$0xff]
      %v451 = vld [vmem:[%s8 + $0x8] sm:$0xff]
      %v452 = vld [vmem:[%s8 + $0x10] sm:$0xff]
      %v453 = vld [vmem:[%s8 + $0x18] sm:$0xff]
      %v455 = vsel %vm394, %v436, 0
      %v458 = vsel %vm394, %v439, 0
      %v461 = vsel %vm394, %v444, 0
      %v464 = vsel %vm394, %v447, 0
      %466 = vmatprep.subr.mxu0 0.0
      %467 = vmatpush1.msra.mxu0 0.0
      %468 = vmatprep.subr.mxu0 0.0
      %469 = vmatpush1.msra.mxu0 0.0
      %470 = vmatprep.subr.mxu0 0.0
      %471 = vmatpush1.msra.mxu0 0.0
      %472 = vmatprep.subr.mxu0 0.0
      %473 = vmatpush1.msra.mxu0 0.0
      %474 = vmatprep.subr.mxu0 0.0
      %475 = vmatpush1.msra.mxu0 0.0
      %476 = vmatprep.subr.mxu0 0.0
      %477 = vmatpush1.msra.mxu0 0.0
      %478 = vmatprep.subr.mxu0 0.0
      %479 = vmatpush1.msra.mxu0 0.0
      %480 = vmatprep.subr.mxu0 0.0
      %481 = vmatpush1.msra.mxu0 0.0
      %482 = vmatprep.subr.mxu0 0.0
      %483 = vmatpush1.msra.mxu0 0.0
      %484 = vmatprep.subr.mxu0 0.0
      %485 = vmatpush1.msra.mxu0 0.0
      %486 = vmatprep.subr.mxu0 0.0
      %487 = vmatpush1.msra.mxu0 0.0
      %488 = vmatprep.subr.mxu0 0.0
      %489 = vmatpush1.msra.mxu0 0.0
      %490 = vmatprep.subr.mxu0 0.0
      %491 = vmatpush1.msra.mxu0 %v453
      %492 = vmatprep.subr.mxu0 0.0
      %493 = vmatpush1.msra.mxu0 %v452
      %494 = vmatprep.subr.mxu0 0.0
      %495 = vmatpush1.msra.mxu0 %v451
      %496 = vmatprep.subr.mxu0 0.0
      %497 = vmatpush1.msra.mxu0 %v450
      %498 = vmatprep.subr.mxu0 0.0
      %499 = vmatpush2.msra.mxu0 0.0
      %500 = vmatprep.subr.mxu0 0.0
      %501 = vmatpush2.msra.mxu0 0.0
      %502 = vmatprep.subr.mxu0 0.0
      %503 = vmatpush2.msra.mxu0 0.0
      %504 = vmatprep.subr.mxu0 0.0
      %505 = vmatpush2.msra.mxu0 0.0
      %506 = vmatprep.subr.mxu0 0.0
      %507 = vmatpush2.msra.mxu0 0.0
      %508 = vmatprep.subr.mxu0 0.0
      %509 = vmatpush2.msra.mxu0 0.0
      %510 = vmatprep.subr.mxu0 0.0
      %511 = vmatpush2.msra.mxu0 0.0
      %512 = vmatprep.subr.mxu0 0.0
      %513 = vmatpush2.msra.mxu0 0.0
      %514 = vmatprep.subr.mxu0 0.0
      %515 = vmatpush2.msra.mxu0 0.0
      %516 = vmatprep.subr.mxu0 0.0
      %517 = vmatpush2.msra.mxu0 0.0
      %518 = vmatprep.subr.mxu0 0.0
      %519 = vmatpush2.msra.mxu0 0.0
      %520 = vmatprep.subr.mxu0 0.0
      %521 = vmatpush2.msra.mxu0 0.0
      %522 = vmatprep.subr.mxu0 0.0
      %523 = vmatpush2.msra.mxu0 0.0
      %524 = vmatprep.subr.mxu0 0.0
      %525 = vmatpush2.msra.mxu0 0.0
      %526 = vmatprep.subr.mxu0 0.0
      %527 = vmatpush2.msra.mxu0 0.0
      %528 = vmatprep.subr.mxu0 0.0
      %529 = vmatpush2.msra.mxu0 0.0
      %530 = vmatprep.mubr.f32.mxu0 0.0
      %531 = vmatmul.mubr.f32.gmra.mxu0 %v455
      %v532 = vpop.f32.mrf.mxu0
      %v533 = vadd.f32 0.0, %v532
      %v534 = vpop.f32.mrf.mxu0
      %535 = vmatprep.mubr.f32.mxu0 0.0
      %536 = vmatmul.mubr.f32.gmra.mxu0 %v458
      %v537 = vpop.f32.mrf.mxu0
      %v538 = vadd.f32 0.0, %v537
      %v539 = vpop.f32.mrf.mxu0
      %540 = vmatprep.mubr.f32.mxu0 0.0
      %541 = vmatmul.mubr.f32.gmra.mxu0 %v461
      %v542 = vpop.f32.mrf.mxu0
      %v543 = vadd.f32 0.0, %v542
      %v544 = vpop.f32.mrf.mxu0
      %545 = vmatprep.mubr.f32.mxu0 0.0
      %546 = vmatmul.mubr.f32.gmra.mxu0 %v464
      %v547 = vpop.f32.mrf.mxu0
      %v548 = vadd.f32 0.0, %v547
      %v549 = vpop.f32.mrf.mxu0
      %550 = vdwg.mxu0
      %v551 = vsub.f32 %v436, %v533
      %v552 = vsub.f32 %v439, %v538
      %v553 = vsub.f32 %v444, %v543
      %v554 = vsub.f32 %v447, %v548
      %v555 = vmul.f32 %v551, %v551
      %v556 = vmul.f32 %v552, %v552
      %v557 = vmul.f32 %v553, %v553
      %v558 = vmul.f32 %v554, %v554
      %v560 = vsel %vm394, %v555, 0
      %v563 = vsel %vm394, %v556, 0
      %v566 = vsel %vm394, %v557, 0
      %v569 = vsel %vm394, %v558, 0
      %571 = vmatprep.subr.mxu0 0.0
      %572 = vmatpush1.msra.mxu0 0.0
      %573 = vmatprep.subr.mxu0 0.0
      %574 = vmatpush1.msra.mxu0 0.0
      %575 = vmatprep.subr.mxu0 0.0
      %576 = vmatpush1.msra.mxu0 0.0
      %577 = vmatprep.subr.mxu0 0.0
      %578 = vmatpush1.msra.mxu0 0.0
      %579 = vmatprep.subr.mxu0 0.0
      %580 = vmatpush1.msra.mxu0 0.0
      %581 = vmatprep.subr.mxu0 0.0
      %582 = vmatpush1.msra.mxu0 0.0
      %583 = vmatprep.subr.mxu0 0.0
      %584 = vmatpush1.msra.mxu0 0.0
      %585 = vmatprep.subr.mxu0 0.0
      %586 = vmatpush1.msra.mxu0 0.0
      %587 = vmatprep.subr.mxu0 0.0
      %588 = vmatpush1.msra.mxu0 0.0
      %589 = vmatprep.subr.mxu0 0.0
      %590 = vmatpush1.msra.mxu0 0.0
      %591 = vmatprep.subr.mxu0 0.0
      %592 = vmatpush1.msra.mxu0 0.0
      %593 = vmatprep.subr.mxu0 0.0
      %594 = vmatpush1.msra.mxu0 0.0
      %595 = vmatprep.subr.mxu0 0.0
      %596 = vmatpush1.msra.mxu0 %v453
      %597 = vmatprep.subr.mxu0 0.0
      %598 = vmatpush1.msra.mxu0 %v452
      %599 = vmatprep.subr.mxu0 0.0
      %600 = vmatpush1.msra.mxu0 %v451
      %601 = vmatprep.subr.mxu0 0.0
      %602 = vmatpush1.msra.mxu0 %v450
      %603 = vmatprep.subr.mxu0 0.0
      %604 = vmatpush2.msra.mxu0 0.0
      %605 = vmatprep.subr.mxu0 0.0
      %606 = vmatpush2.msra.mxu0 0.0
      %607 = vmatprep.subr.mxu0 0.0
      %608 = vmatpush2.msra.mxu0 0.0
      %609 = vmatprep.subr.mxu0 0.0
      %610 = vmatpush2.msra.mxu0 0.0
      %611 = vmatprep.subr.mxu0 0.0
      %612 = vmatpush2.msra.mxu0 0.0
      %613 = vmatprep.subr.mxu0 0.0
      %614 = vmatpush2.msra.mxu0 0.0
      %615 = vmatprep.subr.mxu0 0.0
      %616 = vmatpush2.msra.mxu0 0.0
      %617 = vmatprep.subr.mxu0 0.0
      %618 = vmatpush2.msra.mxu0 0.0
      %619 = vmatprep.subr.mxu0 0.0
      %620 = vmatpush2.msra.mxu0 0.0
      %621 = vmatprep.subr.mxu0 0.0
      %622 = vmatpush2.msra.mxu0 0.0
      %623 = vmatprep.subr.mxu0 0.0
      %624 = vmatpush2.msra.mxu0 0.0
      %625 = vmatprep.subr.mxu0 0.0
      %626 = vmatpush2.msra.mxu0 0.0
      %627 = vmatprep.subr.mxu0 0.0
      %628 = vmatpush2.msra.mxu0 0.0
      %629 = vmatprep.subr.mxu0 0.0
      %630 = vmatpush2.msra.mxu0 0.0
      %631 = vmatprep.subr.mxu0 0.0
      %632 = vmatpush2.msra.mxu0 0.0
      %633 = vmatprep.subr.mxu0 0.0
      %634 = vmatpush2.msra.mxu0 0.0
      %635 = vmatprep.mubr.f32.mxu0 0.0
      %636 = vmatmul.mubr.f32.gmra.mxu0 %v560
      %v637 = vpop.f32.mrf.mxu0
      %v638 = vadd.f32 1e-05, %v637
      %v639 = vpop.f32.mrf.mxu0
      %640 = vmatprep.mubr.f32.mxu0 0.0
      %641 = vmatmul.mubr.f32.gmra.mxu0 %v563
      %v642 = vpop.f32.mrf.mxu0
      %v643 = vadd.f32 1e-05, %v642
      %v644 = vpop.f32.mrf.mxu0
      %645 = vmatprep.mubr.f32.mxu0 0.0
      %646 = vmatmul.mubr.f32.gmra.mxu0 %v566
      %v647 = vpop.f32.mrf.mxu0
      %v648 = vadd.f32 1e-05, %v647
      %v649 = vpop.f32.mrf.mxu0
      %650 = vmatprep.mubr.f32.mxu0 0.0
      %651 = vmatmul.mubr.f32.gmra.mxu0 %v569
      %v652 = vpop.f32.mrf.mxu0
      %v653 = vadd.f32 1e-05, %v652
      %v654 = vpop.f32.mrf.mxu0
      %655 = vdwg.mxu0
      %v656 = vrsqrt.pop %v638
      %v657 = vrsqrt.pop %v643
      %v658 = vrsqrt.pop %v648
      %v659 = vrsqrt.pop %v653
      %v660 = vmul.f32 %v551, %v656
      %v661 = vmul.f32 %v552, %v657
      %v662 = vmul.f32 %v553, %v658
      %v663 = vmul.f32 %v554, %v659
      %v664 = vld [vmem:[%s4] sm:$0x1]
      %v666 = vlaneseq
      %v667 = vshrl.u32 %v666, 7
      %v668 = vsub.s32 0, %v667
      %v669 = vrot.slane %v664, %v668
      %v671 = vmul.f32 %v660, %v669
      %v672 = vmul.f32 %v661, %v669
      %v673 = vmul.f32 %v662, %v669
      %v674 = vmul.f32 %v663, %v669
      %v675 = vld [vmem:[%s5] sm:$0x1]
      %v677 = vlaneseq
      %v678 = vshrl.u32 %v677, 7
      %v679 = vsub.s32 0, %v678
      %v680 = vrot.slane %v675, %v679
      %v682 = vadd.f32 %v671, %v680
      %v683 = vadd.f32 %v672, %v680
      %v684 = vadd.f32 %v673, %v680
      %v685 = vadd.f32 %v674, %v680
      %v686 = vmax.f32 %v682, 0.0
      %v687 = vmax.f32 %v683, 0.0
      %v688 = vmax.f32 %v684, 0.0
      %v689 = vmax.f32 %v685, 0.0
      %v690 = vpack.c.bf16 %v687, %v686
      %v691 = vpack.c.bf16 %v689, %v688
      %v692 = vld [vmem:[%s2] sm:$0xf]
      %v693 = vld [vmem:[%s2 + $0x4] sm:$0xf]
      %v694 = vld [vmem:[%s2 + $0x8] sm:$0xf]
      %v695 = vld [vmem:[%s2 + $0xc] sm:$0xf]
      %v700 = vunpack.c.l.b16 %v692
      %v701 = vunpack.c.l.b16 %v693
      %v702 = vunpack.c.l.b16 %v694
      %v703 = vunpack.c.l.b16 %v695
      %v704 = vpack.c.b16 %v701, %v700
      %v705 = vpack.c.b16 %v703, %v702
      %v709 = vsel %vm394, %v690, 0
      %v712 = vsel %vm394, %v691, 0
      %714 = vmatprep.subr.bf16.mxu0 0
      %715 = vmatpush1.bf16.msra.mxu0 0
      %716 = vmatprep.subr.bf16.mxu0 0
      %717 = vmatpush1.bf16.msra.mxu0 0
      %718 = vmatprep.subr.bf16.mxu0 0
      %719 = vmatpush1.bf16.msra.mxu0 0
      %720 = vmatprep.subr.bf16.mxu0 0
      %721 = vmatpush1.bf16.msra.mxu0 0
      %722 = vmatprep.subr.bf16.mxu0 0
      %723 = vmatpush1.bf16.msra.mxu0 0
      %724 = vmatprep.subr.bf16.mxu0 0
      %725 = vmatpush1.bf16.msra.mxu0 0
      %726 = vmatprep.subr.bf16.mxu0 0
      %727 = vmatpush1.bf16.msra.mxu0 %v705
      %728 = vmatprep.subr.bf16.mxu0 0
      %729 = vmatpush1.bf16.msra.mxu0 %v704
      %730 = vmatprep.subr.bf16.mxu0 0
      %731 = vmatpush2.bf16.msra.mxu0 0
      %732 = vmatprep.subr.bf16.mxu0 0
      %733 = vmatpush2.bf16.msra.mxu0 0
      %734 = vmatprep.subr.bf16.mxu0 0
      %735 = vmatpush2.bf16.msra.mxu0 0
      %736 = vmatprep.subr.bf16.mxu0 0
      %737 = vmatpush2.bf16.msra.mxu0 0
      %738 = vmatprep.subr.bf16.mxu0 0
      %739 = vmatpush2.bf16.msra.mxu0 0
      %740 = vmatprep.subr.bf16.mxu0 0
      %741 = vmatpush2.bf16.msra.mxu0 0
      %742 = vmatprep.subr.bf16.mxu0 0
      %743 = vmatpush2.bf16.msra.mxu0 0
      %744 = vmatprep.subr.bf16.mxu0 0
      %745 = vmatpush2.bf16.msra.mxu0 0
      %746 = vmatprep.mubr.bf16.mxu0 0
      %747 = vmatmul.mubr.bf16.gmra.mxu0 %v709
      %v748 = vpop.f32.mrf.mxu0
      %v749 = vadd.f32 0.0, %v748
      %v750 = vpop.f32.mrf.mxu0
      %v751 = vpop.f32.mrf.mxu0
      %v752 = vadd.f32 0.0, %v751
      %v753 = vpop.f32.mrf.mxu0
      %754 = vmatprep.mubr.bf16.mxu0 0
      %755 = vmatmul.mubr.bf16.gmra.mxu0 %v712
      %v756 = vpop.f32.mrf.mxu0
      %v757 = vadd.f32 0.0, %v756
      %v758 = vpop.f32.mrf.mxu0
      %v759 = vpop.f32.mrf.mxu0
      %v760 = vadd.f32 0.0, %v759
      %v761 = vpop.f32.mrf.mxu0
      %762 = vdwg.mxu0
      %v763 = vld [vmem:[%s9] sm:$0xff]
      %v764 = vld [vmem:[%s9 + $0x8] sm:$0xff]
      %v765 = vld [vmem:[%s9 + $0x10] sm:$0xff]
      %v766 = vld [vmem:[%s9 + $0x18] sm:$0xff]
      %v767 = vld [vmem:[%s9 + $0x20] sm:$0xff]
      %v768 = vld [vmem:[%s9 + $0x28] sm:$0xff]
      %v769 = vld [vmem:[%s9 + $0x30] sm:$0xff]
      %v770 = vld [vmem:[%s9 + $0x38] sm:$0xff]
      %v771 = vld [vmem:[%s9 + $0x40] sm:$0xff]
      %v772 = vld [vmem:[%s9 + $0x48] sm:$0xff]
      %v773 = vld [vmem:[%s9 + $0x50] sm:$0xff]
      %v774 = vld [vmem:[%s9 + $0x58] sm:$0xff]
      %v775 = vld [vmem:[%s9 + $0x60] sm:$0xff]
      %v776 = vld [vmem:[%s9 + $0x68] sm:$0xff]
      %v777 = vld [vmem:[%s9 + $0x70] sm:$0xff]
      %v778 = vld [vmem:[%s9 + $0x78] sm:$0xff]
      %779 = vmatprep.subr.mxu0 0.0
      %780 = vmatpush1.msra.mxu0 %v778
      %781 = vmatprep.subr.mxu0 0.0
      %782 = vmatpush1.msra.mxu0 %v777
      %783 = vmatprep.subr.mxu0 0.0
      %784 = vmatpush1.msra.mxu0 %v776
      %785 = vmatprep.subr.mxu0 0.0
      %786 = vmatpush1.msra.mxu0 %v775
      %787 = vmatprep.subr.mxu0 0.0
      %788 = vmatpush1.msra.mxu0 %v774
      %789 = vmatprep.subr.mxu0 0.0
      %790 = vmatpush1.msra.mxu0 %v773
      %791 = vmatprep.subr.mxu0 0.0
      %792 = vmatpush1.msra.mxu0 %v772
      %793 = vmatprep.subr.mxu0 0.0
      %794 = vmatpush1.msra.mxu0 %v771
      %795 = vmatprep.subr.mxu0 0.0
      %796 = vmatpush1.msra.mxu0 %v770
      %797 = vmatprep.subr.mxu0 0.0
      %798 = vmatpush1.msra.mxu0 %v769
      %799 = vmatprep.subr.mxu0 0.0
      %800 = vmatpush1.msra.mxu0 %v768
      %801 = vmatprep.subr.mxu0 0.0
      %802 = vmatpush1.msra.mxu0 %v767
      %803 = vmatprep.subr.mxu0 0.0
      %804 = vmatpush1.msra.mxu0 %v766
      %805 = vmatprep.subr.mxu0 0.0
      %806 = vmatpush1.msra.mxu0 %v765
      %807 = vmatprep.subr.mxu0 0.0
      %808 = vmatpush1.msra.mxu0 %v764
      %809 = vmatprep.subr.mxu0 0.0
      %810 = vmatpush1.msra.mxu0 %v763
      %811 = vmatprep.subr.mxu0 0.0
      %812 = vmatpush2.msra.mxu0 0.0
      %813 = vmatprep.subr.mxu0 0.0
      %814 = vmatpush2.msra.mxu0 0.0
      %815 = vmatprep.subr.mxu0 0.0
      %816 = vmatpush2.msra.mxu0 0.0
      %817 = vmatprep.subr.mxu0 0.0
      %818 = vmatpush2.msra.mxu0 0.0
      %819 = vmatprep.subr.mxu0 0.0
      %820 = vmatpush2.msra.mxu0 0.0
      %821 = vmatprep.subr.mxu0 0.0
      %822 = vmatpush2.msra.mxu0 0.0
      %823 = vmatprep.subr.mxu0 0.0
      %824 = vmatpush2.msra.mxu0 0.0
      %825 = vmatprep.subr.mxu0 0.0
      %826 = vmatpush2.msra.mxu0 0.0
      %827 = vmatprep.subr.mxu0 0.0
      %828 = vmatpush2.msra.mxu0 0.0
      %829 = vmatprep.subr.mxu0 0.0
      %830 = vmatpush2.msra.mxu0 0.0
      %831 = vmatprep.subr.mxu0 0.0
      %832 = vmatpush2.msra.mxu0 0.0
      %833 = vmatprep.subr.mxu0 0.0
      %834 = vmatpush2.msra.mxu0 0.0
      %835 = vmatprep.subr.mxu0 0.0
      %836 = vmatpush2.msra.mxu0 0.0
      %837 = vmatprep.subr.mxu0 0.0
      %838 = vmatpush2.msra.mxu0 0.0
      %839 = vmatprep.subr.mxu0 0.0
      %840 = vmatpush2.msra.mxu0 0.0
      %841 = vmatprep.subr.mxu0 0.0
      %842 = vmatpush2.msra.mxu0 0.0
      %843 = vmatprep.mubr.f32.mxu0 0.0
      %844 = vmatmul.mubr.f32.gmra.mxu0 %v749
      %v845 = vpop.f32.mrf.mxu0
      %v846 = vadd.f32 0.0, %v845
      %v847 = vpop.f32.mrf.mxu0
      %848 = vmatprep.mubr.f32.mxu0 0.0
      %849 = vmatmul.mubr.f32.gmra.mxu0 %v752
      %v850 = vpop.f32.mrf.mxu0
      %v851 = vadd.f32 0.0, %v850
      %v852 = vpop.f32.mrf.mxu0
      %853 = vmatprep.mubr.f32.mxu0 0.0
      %854 = vmatmul.mubr.f32.gmra.mxu0 %v757
      %v855 = vpop.f32.mrf.mxu0
      %v856 = vadd.f32 0.0, %v855
      %v857 = vpop.f32.mrf.mxu0
      %858 = vmatprep.mubr.f32.mxu0 0.0
      %859 = vmatmul.mubr.f32.gmra.mxu0 %v760
      %v860 = vpop.f32.mrf.mxu0
      %v861 = vadd.f32 0.0, %v860
      %v862 = vpop.f32.mrf.mxu0
      %863 = vdwg.mxu0
      %v864 = vsub.f32 %v749, %v846
      %v865 = vsub.f32 %v752, %v851
      %v866 = vsub.f32 %v757, %v856
      %v867 = vsub.f32 %v760, %v861
      %v868 = vmul.f32 %v864, %v864
      %v869 = vmul.f32 %v865, %v865
      %v870 = vmul.f32 %v866, %v866
      %v871 = vmul.f32 %v867, %v867
      %872 = vmatprep.subr.mxu0 0.0
      %873 = vmatpush1.msra.mxu0 %v778
      %874 = vmatprep.subr.mxu0 0.0
      %875 = vmatpush1.msra.mxu0 %v777
      %876 = vmatprep.subr.mxu0 0.0
      %877 = vmatpush1.msra.mxu0 %v776
      %878 = vmatprep.subr.mxu0 0.0
      %879 = vmatpush1.msra.mxu0 %v775
      %880 = vmatprep.subr.mxu0 0.0
      %881 = vmatpush1.msra.mxu0 %v774
      %882 = vmatprep.subr.mxu0 0.0
      %883 = vmatpush1.msra.mxu0 %v773
      %884 = vmatprep.subr.mxu0 0.0
      %885 = vmatpush1.msra.mxu0 %v772
      %886 = vmatprep.subr.mxu0 0.0
      %887 = vmatpush1.msra.mxu0 %v771
      %888 = vmatprep.subr.mxu0 0.0
      %889 = vmatpush1.msra.mxu0 %v770
      %890 = vmatprep.subr.mxu0 0.0
      %891 = vmatpush1.msra.mxu0 %v769
      %892 = vmatprep.subr.mxu0 0.0
      %893 = vmatpush1.msra.mxu0 %v768
      %894 = vmatprep.subr.mxu0 0.0
      %895 = vmatpush1.msra.mxu0 %v767
      %896 = vmatprep.subr.mxu0 0.0
      %897 = vmatpush1.msra.mxu0 %v766
      %898 = vmatprep.subr.mxu0 0.0
      %899 = vmatpush1.msra.mxu0 %v765
      %900 = vmatprep.subr.mxu0 0.0
      %901 = vmatpush1.msra.mxu0 %v764
      %902 = vmatprep.subr.mxu0 0.0
      %903 = vmatpush1.msra.mxu0 %v763
      %904 = vmatprep.subr.mxu0 0.0
      %905 = vmatpush2.msra.mxu0 0.0
      %906 = vmatprep.subr.mxu0 0.0
      %907 = vmatpush2.msra.mxu0 0.0
      %908 = vmatprep.subr.mxu0 0.0
      %909 = vmatpush2.msra.mxu0 0.0
      %910 = vmatprep.subr.mxu0 0.0
      %911 = vmatpush2.msra.mxu0 0.0
      %912 = vmatprep.subr.mxu0 0.0
      %913 = vmatpush2.msra.mxu0 0.0
      %914 = vmatprep.subr.mxu0 0.0
      %915 = vmatpush2.msra.mxu0 0.0
      %916 = vmatprep.subr.mxu0 0.0
      %917 = vmatpush2.msra.mxu0 0.0
      %918 = vmatprep.subr.mxu0 0.0
      %919 = vmatpush2.msra.mxu0 0.0
      %920 = vmatprep.subr.mxu0 0.0
      %921 = vmatpush2.msra.mxu0 0.0
      %922 = vmatprep.subr.mxu0 0.0
      %923 = vmatpush2.msra.mxu0 0.0
      %924 = vmatprep.subr.mxu0 0.0
      %925 = vmatpush2.msra.mxu0 0.0
      %926 = vmatprep.subr.mxu0 0.0
      %927 = vmatpush2.msra.mxu0 0.0
      %928 = vmatprep.subr.mxu0 0.0
      %929 = vmatpush2.msra.mxu0 0.0
      %930 = vmatprep.subr.mxu0 0.0
      %931 = vmatpush2.msra.mxu0 0.0
      %932 = vmatprep.subr.mxu0 0.0
      %933 = vmatpush2.msra.mxu0 0.0
      %934 = vmatprep.subr.mxu0 0.0
      %935 = vmatpush2.msra.mxu0 0.0
      %936 = vmatprep.mubr.f32.mxu0 0.0
      %937 = vmatmul.mubr.f32.gmra.mxu0 %v868
      %v938 = vpop.f32.mrf.mxu0
      %v939 = vadd.f32 1e-05, %v938
      %v940 = vpop.f32.mrf.mxu0
      %941 = vmatprep.mubr.f32.mxu0 0.0
      %942 = vmatmul.mubr.f32.gmra.mxu0 %v869
      %v943 = vpop.f32.mrf.mxu0
      %v944 = vadd.f32 1e-05, %v943
      %v945 = vpop.f32.mrf.mxu0
      %946 = vmatprep.mubr.f32.mxu0 0.0
      %947 = vmatmul.mubr.f32.gmra.mxu0 %v870
      %v948 = vpop.f32.mrf.mxu0
      %v949 = vadd.f32 1e-05, %v948
      %v950 = vpop.f32.mrf.mxu0
      %951 = vmatprep.mubr.f32.mxu0 0.0
      %952 = vmatmul.mubr.f32.gmra.mxu0 %v871
      %v953 = vpop.f32.mrf.mxu0
      %v954 = vadd.f32 1e-05, %v953
      %v955 = vpop.f32.mrf.mxu0
      %956 = vdwg.mxu0
      %v957 = vrsqrt.pop %v939
      %v958 = vrsqrt.pop %v944
      %v959 = vrsqrt.pop %v949
      %v960 = vrsqrt.pop %v954
      %v961 = vmul.f32 %v864, %v957
      %v962 = vmul.f32 %v865, %v958
      %v963 = vmul.f32 %v866, %v959
      %v964 = vmul.f32 %v867, %v960
      %v965 = vld [vmem:[%s6] sm:$0x1]
      %v967 = vlaneseq
      %v968 = vshrl.u32 %v967, 7
      %v969 = vsub.s32 0, %v968
      %v970 = vrot.slane %v965, %v969
      %v972 = vmul.f32 %v961, %v970
      %v973 = vmul.f32 %v962, %v970
      %v974 = vmul.f32 %v963, %v970
      %v975 = vmul.f32 %v964, %v970
      %v976 = vld [vmem:[%s7] sm:$0x1]
      %v978 = vlaneseq
      %v979 = vshrl.u32 %v978, 7
      %v980 = vsub.s32 0, %v979
      %v981 = vrot.slane %v976, %v980
      %v983 = vadd.f32 %v972, %v981
      %v984 = vadd.f32 %v973, %v981
      %v985 = vadd.f32 %v974, %v981
      %v986 = vadd.f32 %v975, %v981
      %v987 = vmax.f32 %v983, 0.0
      %v988 = vmax.f32 %v984, 0.0
      %v989 = vmax.f32 %v985, 0.0
      %v990 = vmax.f32 %v986, 0.0
      %v991 = vpack.c.bf16 %v988, %v987
      %v992 = vpack.c.bf16 %v990, %v989
      %v993 = vld [vmem:[%s3] sm:$0xf]
      %v994 = vld [vmem:[%s3 + $0x4] sm:$0xf]
      %v995 = vld [vmem:[%s3 + $0x8] sm:$0xf]
      %v996 = vld [vmem:[%s3 + $0xc] sm:$0xf]
      %v997 = vld [vmem:[%s3 + $0x10] sm:$0xf]
      %v998 = vld [vmem:[%s3 + $0x14] sm:$0xf]
      %v999 = vld [vmem:[%s3 + $0x18] sm:$0xf]
      %v1000 = vld [vmem:[%s3 + $0x1c] sm:$0xf]
      %v1001 = vld [vmem:[%s3 + $0x20] sm:$0xf]
      %v1002 = vld [vmem:[%s3 + $0x24] sm:$0xf]
      %v1003 = vld [vmem:[%s3 + $0x28] sm:$0xf]
      %v1004 = vld [vmem:[%s3 + $0x2c] sm:$0xf]
      %v1005 = vld [vmem:[%s3 + $0x30] sm:$0xf]
      %v1006 = vld [vmem:[%s3 + $0x34] sm:$0xf]
      %v1007 = vld [vmem:[%s3 + $0x38] sm:$0xf]
      %v1008 = vld [vmem:[%s3 + $0x3c] sm:$0xf]
      %v1025 = vunpack.c.l.b16 %v993
      %v1026 = vunpack.c.l.b16 %v994
      %v1027 = vunpack.c.l.b16 %v995
      %v1028 = vunpack.c.l.b16 %v996
      %v1029 = vunpack.c.l.b16 %v997
      %v1030 = vunpack.c.l.b16 %v998
      %v1031 = vunpack.c.l.b16 %v999
      %v1032 = vunpack.c.l.b16 %v1000
      %v1033 = vunpack.c.l.b16 %v1001
      %v1034 = vunpack.c.l.b16 %v1002
      %v1035 = vunpack.c.l.b16 %v1003
      %v1036 = vunpack.c.l.b16 %v1004
      %v1037 = vunpack.c.l.b16 %v1005
      %v1038 = vunpack.c.l.b16 %v1006
      %v1039 = vunpack.c.l.b16 %v1007
      %v1040 = vunpack.c.l.b16 %v1008
      %v1041 = vpack.c.b16 %v1026, %v1025
      %v1042 = vpack.c.b16 %v1028, %v1027
      %v1043 = vpack.c.b16 %v1030, %v1029
      %v1044 = vpack.c.b16 %v1032, %v1031
      %v1045 = vpack.c.b16 %v1034, %v1033
      %v1046 = vpack.c.b16 %v1036, %v1035
      %v1047 = vpack.c.b16 %v1038, %v1037
      %v1048 = vpack.c.b16 %v1040, %v1039
      %1057 = vmatprep.subr.bf16.mxu0 0
      %1058 = vmatpush1.bf16.msra.mxu0 %v1048
      %1059 = vmatprep.subr.bf16.mxu0 0
      %1060 = vmatpush1.bf16.msra.mxu0 %v1047
      %1061 = vmatprep.subr.bf16.mxu0 0
      %1062 = vmatpush1.bf16.msra.mxu0 %v1046
      %1063 = vmatprep.subr.bf16.mxu0 0
      %1064 = vmatpush1.bf16.msra.mxu0 %v1045
      %1065 = vmatprep.subr.bf16.mxu0 0
      %1066 = vmatpush1.bf16.msra.mxu0 %v1044
      %1067 = vmatprep.subr.bf16.mxu0 0
      %1068 = vmatpush1.bf16.msra.mxu0 %v1043
      %1069 = vmatprep.subr.bf16.mxu0 0
      %1070 = vmatpush1.bf16.msra.mxu0 %v1042
      %1071 = vmatprep.subr.bf16.mxu0 0
      %1072 = vmatpush1.bf16.msra.mxu0 %v1041
      %1073 = vmatprep.subr.bf16.mxu0 0
      %1074 = vmatpush2.bf16.msra.mxu0 0
      %1075 = vmatprep.subr.bf16.mxu0 0
      %1076 = vmatpush2.bf16.msra.mxu0 0
      %1077 = vmatprep.subr.bf16.mxu0 0
      %1078 = vmatpush2.bf16.msra.mxu0 0
      %1079 = vmatprep.subr.bf16.mxu0 0
      %1080 = vmatpush2.bf16.msra.mxu0 0
      %1081 = vmatprep.subr.bf16.mxu0 0
      %1082 = vmatpush2.bf16.msra.mxu0 0
      %1083 = vmatprep.subr.bf16.mxu0 0
      %1084 = vmatpush2.bf16.msra.mxu0 0
      %1085 = vmatprep.subr.bf16.mxu0 0
      %1086 = vmatpush2.bf16.msra.mxu0 0
      %1087 = vmatprep.subr.bf16.mxu0 0
      %1088 = vmatpush2.bf16.msra.mxu0 0
      %1089 = vmatprep.mubr.bf16.mxu0 0
      %1090 = vmatmul.mubr.bf16.gmra.mxu0 %v991
      %v1091 = vpop.f32.mrf.mxu0
      %v1092 = vadd.f32 0.0, %v1091
      %v1093 = vpop.f32.mrf.mxu0
      %v1094 = vpop.f32.mrf.mxu0
      %v1095 = vadd.f32 0.0, %v1094
      %v1096 = vpop.f32.mrf.mxu0
      %1097 = vmatprep.mubr.bf16.mxu0 0
      %1098 = vmatmul.mubr.bf16.gmra.mxu0 %v992
      %v1099 = vpop.f32.mrf.mxu0
      %v1100 = vadd.f32 0.0, %v1099
      %v1101 = vpop.f32.mrf.mxu0
      %v1102 = vpop.f32.mrf.mxu0
      %v1103 = vadd.f32 0.0, %v1102
      %v1104 = vpop.f32.mrf.mxu0
      %1105 = vdwg.mxu0
      %vm1106 = vcmask 31744
      %1107 = vst.msk [vmem:[%s361] sm:$0xff] %vm1106, %v1092
      %1108 = vst.msk [vmem:[%s361 + $0x8] sm:$0xff] %vm1106, %v1095
      %1109 = vst.msk [vmem:[%s361 + $0x10] sm:$0xff] %vm1106, %v1100
      %1110 = vst.msk [vmem:[%s361 + $0x18] sm:$0xff] %vm1106, %v1103
      %s1111 = smul.u32 4, %s21
      %p1112 = scmp.lt.s32.totalorder %s1111, 7
      %s1113 = scalar_select %p1112, %s1111, 7
      %s1114 = smul.addr %s1113, 8
      %s1115 = scalar_lea.vmem %s10, %s1114
      // Predicated region
      $region61: #{csce_forward.1} parent=59 // pred_check
        %p1116 = pneg %p254
      $region62: #{csce_forward.1} parent=59 // pred_check_branch
        %1118 = sbr.rel (%p1116) target = $region64
      $region63: #{csce_forward.1} parent=59 // pred_region
        %s1119 = smul.u32 4, %s21
      $region64: #{csce_forward.1} parent=59 // pred_fallthru
        _
    $region60: #{csce_forward.1} parent=5 // pred_fallthru
      _
    %p1120 = scmp.le.s32.totalorder 2, %s16
    // Predicated region
    $region65: #{csce_forward.1} parent=5 // pred_check
      %p1121 = pneg %p1120
    $region66: #{csce_forward.1} parent=5 // pred_check_branch
      %1123 = sbr.rel (%p1121) target = $region68
    $region67: #{csce_forward.1} parent=5 // pred_region
      %s1124 = ssub.s32 %s16, 2
      // Predicated region
      $region69: #{csce_forward.1} parent=67 // pred_check
        %p1125 = pneg %p260
      $region70: #{csce_forward.1} parent=67 // pred_check_branch
        %1127 = sbr.rel (%p1125) target = $region72
      $region71: #{csce_forward.1} parent=67 // pred_region
        %s1128 = smul.u32 4, %s22
        %p1129 = scmp.lt.s32.totalorder %s1128, 7
        %s1130 = scalar_select %p1129, %s1128, 7
        %s1131 = smul.addr %s1130, 8
        %s1132 = scalar_lea.vmem %s10, %s1131
      $region72: #{csce_forward.1} parent=67 // pred_fallthru
        _
    $region68: #{csce_forward.1} parent=5 // pred_fallthru
      _
  $region6: #{csce_forward.1} parent=0 // loop_footer
    %s20 = sadd.s32 1, %s16
  $region7: #{csce_forward.1} parent=0 // loop_footer_branch
    %15 = sbr.rel target = $region3
  $region8: #{csce_forward.1} parent=0 // loop_exit
    _

</llo_original>
